<compile_context>
chip_gen: v7x
topology: tpu7x:2x2x1
jax: 0.10.0
libtpu: 0.0.40
codegen_flags: <defaults>
</compile_context>

<pallas_src>
import jax
import jax.numpy as jnp
from jax.experimental import pallas as pl
from jax.experimental.pallas import tpu as pltpu


# ----------------------------- kernels --------------------------------------


def _linear_kernel_single_k(x_ref, w_ref, b_ref, o_ref):
    # Single K step: no accumulator scratch, no init/finalize passes.
    acc = jax.lax.dot_general(
        x_ref[...],
        w_ref[...],
        dimension_numbers=(((1,), (1,)), ((), ())),   # x @ w.T, no transpose op
        preferred_element_type=jnp.float32,
    )
    o_ref[...] = (acc + b_ref[...].astype(jnp.float32)).astype(o_ref.dtype)


def _linear_kernel_multi_k(x_ref, w_ref, b_ref, o_ref, acc_ref):
    # x_ref  : (tm, tk)       activation tile
    # w_ref  : (tn, tk)       weight tile, PyTorch layout (D_out, D_in)
    # b_ref  : (1,  tn)       bias tile (f32)
    # o_ref  : (tm, tn)       output tile
    # acc_ref: (tm, tn) f32   VMEM accumulator, resident across the K grid axis
    k = pl.program_id(2)

    @pl.when(k == 0)
    def _init():
        # Bias folded into the init write (happens anyway) — finalize is a cast.
        acc_ref[...] = jnp.broadcast_to(
            b_ref[...].astype(jnp.float32), acc_ref.shape
        )

    acc_ref[...] += jax.lax.dot_general(
        x_ref[...],
        w_ref[...],
        dimension_numbers=(((1,), (1,)), ((), ())),
        preferred_element_type=jnp.float32,
    )

    @pl.when(k == pl.num_programs(2) - 1)
    def _finalize():
        o_ref[...] = acc_ref[...].astype(o_ref.dtype)


# -------------------------- tile selection -----------------------------------


def _pick_mn_tile(dim, cap, align):
    """Reuse-aware M/N tile: full dim if it fits, else the largest aligned
    exact divisor <= cap, else cap (cdiv grid with masked edge blocks)."""
    if dim <= cap:
        return dim
    t = (cap // align) * align
    while t >= align:
        if dim % t == 0:
            return t
        t -= align
    return (cap // align) * align  # non-divisor: Pallas masks the edge block


def _pick_k_tile(dim, cap, align):
    """K tile must keep the reduction exact: full dim, or an aligned divisor."""
    if dim <= cap:
        return dim
    t = (cap // align) * align
    while t >= align:
        if dim % t == 0:
            return t
        t -= align
    return dim  # fall back to full K (exactness over tiling)


# ----------------------------- wrapper ---------------------------------------


def projector_forward(
    x,
    weight,
    bias,
    *,
    tm=None,
    tn=None,
    tk=None,
    mxu_dtype=None,
    vmem_limit_bytes=48 * 1024 * 1024,
):
    """Forward pass of Projector: y = x @ weight.T + bias.

    x      : (B, D_in)
    weight : (D_out, D_in)   -- PyTorch nn.Linear layout, NOT transposed
    bias   : (D_out,)
    mxu_dtype: optional narrower dtype (e.g. jnp.bfloat16) to feed the MXU;
               accumulation stays f32, output keeps x's original dtype.
    """
    B, D_in = x.shape
    D_out, D_in_w = weight.shape
    assert D_in == D_in_w, "weight must be (D_out, D_in)"
    out_dtype = x.dtype

    if mxu_dtype is not None:
        x = x.astype(mxu_dtype)
        weight = weight.astype(mxu_dtype)
    b2d = bias.reshape(1, D_out).astype(jnp.float32)

    in_sz = jnp.dtype(x.dtype).itemsize
    out_sz = jnp.dtype(out_dtype).itemsize

    # ---- reuse-aware tile selection (caps sized against the VMEM budget) ----
    tm = tm if tm is not None else _pick_mn_tile(B, 1024, 8)
    tn = tn if tn is not None else _pick_mn_tile(D_out, 1024, 128)
    tk = tk if tk is not None else _pick_k_tile(D_in, 1024, 128)

    def _footprint(tm_, tn_, tk_, multi_k):
        f = 2 * (tm_ * tk_ + tn_ * tk_) * in_sz   # double-buffered x, w tiles
        f += 2 * tn_ * 4                           # double-buffered bias tile
        f += 2 * tm_ * tn_ * out_sz                # double-buffered output tile
        if multi_k:
            f += tm_ * tn_ * 4                     # f32 accumulator scratch
        return f

    budget = int(vmem_limit_bytes * 0.85)
    for _ in range(8):
        if _footprint(tm, tn, tk, (D_in // tk) > 1) <= budget:
            break
        if tk % 256 == 0 and tk >= max(tm, tn):
            tk //= 2
        elif tn % 256 == 0 and tn >= tm:
            tn //= 2
        elif tm % 16 == 0 and tm >= 16:
            tm //= 2
        elif tk % 256 == 0:
            tk //= 2
        elif tn % 256 == 0:
            tn //= 2
        else:
            break

    grid_m = pl.cdiv(B, tm)
    grid_n = pl.cdiv(D_out, tn)
    grid_k = D_in // tk

    # ---- v7x megacore: make sure >=2 iterations exist on a parallel axis ----
    if grid_m * grid_n == 1:
        if tn % 256 == 0:
            tn //= 2
            grid_n = pl.cdiv(D_out, tn)
        elif tm % 16 == 0:
            tm //= 2
            grid_m = pl.cdiv(B, tm)

    cost = pl.CostEstimate(
        flops=2 * B * D_in * D_out,
        transcendentals=0,
        bytes_accessed=(
            x.size * in_sz
            + weight.size * in_sz
            + b2d.size * 4
            + B * D_out * out_sz
        ),
    )

    if grid_k == 1:
        # -------- single-K specialization: no accumulator, no finalize -------
        grid = (grid_m, grid_n)
        in_specs = [
            pl.BlockSpec((tm, tk), lambda i, j: (i, 0)),    # x
            pl.BlockSpec((tn, tk), lambda i, j: (j, 0)),    # weight (D_out, D_in)
            pl.BlockSpec((1, tn), lambda i, j: (0, j)),     # bias
        ]
        out_specs = pl.BlockSpec((tm, tn), lambda i, j: (i, j))
        scratch_shapes = []
        dim_sem = ("parallel", "parallel")
        kernel = _linear_kernel_single_k
    else:
        # -------- multi-K accumulation, K last and "arbitrary" ---------------
        grid = (grid_m, grid_n, grid_k)
        in_specs = [
            pl.BlockSpec((tm, tk), lambda i, j, k: (i, k)),   # x
            pl.BlockSpec((tn, tk), lambda i, j, k: (j, k)),   # weight
            pl.BlockSpec((1, tn), lambda i, j, k: (0, j)),    # bias
        ]
        out_specs = pl.BlockSpec((tm, tn), lambda i, j, k: (i, j))
        scratch_shapes = [pltpu.VMEM((tm, tn), jnp.float32)]
        dim_sem = ("parallel", "parallel", "arbitrary")
        kernel = _linear_kernel_multi_k

    return pl.pallas_call(
        kernel,
        out_shape=jax.ShapeDtypeStruct((B, D_out), out_dtype),
        grid_spec=pltpu.PrefetchScalarGridSpec(
            num_scalar_prefetch=0,
            grid=grid,
            in_specs=in_specs,
            out_specs=out_specs,
            scratch_shapes=scratch_shapes,
        ),
        compiler_params=pltpu.CompilerParams(
            dimension_semantics=dim_sem,
            vmem_limit_bytes=vmem_limit_bytes,
        ),
        cost_estimate=cost,
    )(x, weight, b2d)


# ------------------------------- test ----------------------------------------


if __name__ == "__main__":
    key = jax.random.PRNGKey(0)

    # ---- Small shapes consistent with the module: batch=8, in=32, out=64 ----
    # (single-K fast path, blocks == full arrays)
    B, D_in, D_out = 8, 32, 64
    kx, kw, kb = jax.random.split(key, 3)
    x = jax.random.normal(kx, (B, D_in), dtype=jnp.float32)
    bound = 1.0 / (D_in ** 0.5)  # mimic nn.Linear init scale
    weight = jax.random.uniform(kw, (D_out, D_in), minval=-bound, maxval=bound,
                                dtype=jnp.float32)
    bias = jax.random.uniform(kb, (D_out,), minval=-bound, maxval=bound,
                              dtype=jnp.float32)

    out = projector_forward(x, weight, bias)
    jax.block_until_ready(out)
    ref = x @ weight.T + bias
    assert out.shape == (B, D_out)
    assert jnp.allclose(out, ref, atol=1e-5, rtol=1e-5)

    # ---- Moderate shapes: exercise multi-K accumulate + megacore N split ----
    B2, D_in2, D_out2 = 256, 2048, 512   # tk=1024 -> 2 K steps; tn split 512->256
    k2x, k2w, k2b = jax.random.split(jax.random.PRNGKey(1), 3)
    x2 = jax.random.normal(k2x, (B2, D_in2), dtype=jnp.float32)
    bound2 = 1.0 / (D_in2 ** 0.5)
    w2 = jax.random.uniform(k2w, (D_out2, D_in2), minval=-bound2, maxval=bound2,
                            dtype=jnp.float32)
    b2 = jax.random.uniform(k2b, (D_out2,), minval=-bound2, maxval=bound2,
                            dtype=jnp.float32)

    out2 = projector_forward(x2, w2, b2)
    jax.block_until_ready(out2)
    ref2 = x2 @ w2.T + b2
    assert out2.shape == (B2, D_out2)
    assert jnp.allclose(out2, ref2, atol=1e-3, rtol=1e-3)

    # ---- bf16 MXU-input path (f32 accumulation, f32 output) ----
    out3 = projector_forward(x2, w2, b2, mxu_dtype=jnp.bfloat16)
    jax.block_until_ready(out3)
    ref3 = jnp.dot(x2.astype(jnp.bfloat16), w2.astype(jnp.bfloat16).T,
                   preferred_element_type=jnp.float32) + b2
    assert out3.shape == (B2, D_out2)
    assert jnp.allclose(out3, ref3, atol=2e-2, rtol=2e-2)

    print("KERNEL_OK")
</pallas_src>

<mosaic_0001>
module attributes {stable_mosaic.version = 11 : i64} {
  func.func @_linear_kernel_single_k(%arg0: i32, %arg1: i32, %arg2: memref<8x32xf32, #tpu.memory_space<vmem>>, %arg3: memref<64x32xf32, #tpu.memory_space<vmem>>, %arg4: memref<1x64xf32, #tpu.memory_space<vmem>>, %arg5: memref<8x64xf32, #tpu.memory_space<vmem>>) attributes {dimension_semantics = [#tpu.dimension_semantics<parallel>, #tpu.dimension_semantics<parallel>], iteration_bounds = array<i64: 1, 1>, scalar_prefetch = 0 : i64, scratch_operands = 0 : i64, tpu.core_type = #tpu.core_type<tc>, window_params = [{transform_indices = @transform_0, window_bounds = array<i64: 8, 32>}, {transform_indices = @transform_1, window_bounds = array<i64: 64, 32>}, {transform_indices = @transform_2, window_bounds = array<i64: 1, 64>}, {transform_indices = @transform_3, window_bounds = array<i64: 8, 64>}]} {
    %c0 = arith.constant 0 : index
    %c0_0 = arith.constant 0 : index
    %0 = vector.load %arg2[%c0, %c0_0] : memref<8x32xf32, #tpu.memory_space<vmem>>, vector<8x32xf32>
    %c0_1 = arith.constant 0 : index
    %c0_2 = arith.constant 0 : index
    %1 = vector.load %arg3[%c0_1, %c0_2] : memref<64x32xf32, #tpu.memory_space<vmem>>, vector<64x32xf32>
    %cst = arith.constant dense<0.000000e+00> : vector<8x64xf32>
    %2 = tpu.matmul %0, %1, %cst {dimension_numbers = #tpu.dot_dimension_numbers<[1], [1], [0], [0], [0, 0, 1, 0], [], []>} : vector<8x32xf32>, vector<64x32xf32>, vector<8x64xf32> -> vector<8x64xf32>
    %c0_3 = arith.constant 0 : index
    %c0_4 = arith.constant 0 : index
    %3 = vector.load %arg4[%c0_3, %c0_4] : memref<1x64xf32, #tpu.memory_space<vmem>>, vector<1x64xf32>
    %4 = vector.broadcast %3 : vector<1x64xf32> to vector<8x64xf32>
    %5 = arith.addf %2, %4 : vector<8x64xf32>
    %c0_5 = arith.constant 0 : index
    %c0_6 = arith.constant 0 : index
    %6 = vector.load %arg5[%c0_5, %c0_6] : memref<8x64xf32, #tpu.memory_space<vmem>>, vector<8x64xf32>
    tpu.vector_store %arg5[%c0_5, %c0_6], %5 {strides = array<i32>} : memref<8x64xf32, #tpu.memory_space<vmem>>, vector<8x64xf32>,
    return
  }
  func.func @transform_0(%arg0: i32, %arg1: i32) -> (i32, i32) {
    %c0_i32 = arith.constant 0 : i32
    %c0_i32_0 = arith.constant 0 : i32
    return %arg0, %c0_i32 : i32, i32
  }
  func.func @transform_1(%arg0: i32, %arg1: i32) -> (i32, i32) {
    %c0_i32 = arith.constant 0 : i32
    %c0_i32_0 = arith.constant 0 : i32
    return %arg1, %c0_i32 : i32, i32
  }
  func.func @transform_2(%arg0: i32, %arg1: i32) -> (i32, i32) {
    %c0_i32 = arith.constant 0 : i32
    %c0_i32_0 = arith.constant 0 : i32
    return %c0_i32, %arg1 : i32, i32
  }
  func.func @transform_3(%arg0: i32, %arg1: i32) -> (i32, i32) {
    %c0_i32 = arith.constant 0 : i32
    return %arg0, %arg1 : i32, i32
  }
}

</mosaic_0001>

<llo_original>
// kernel: tpu_custom_call.1
$region0: #{tpu_custom_call.1}
  #allocation0 [shape = 'u32[]', space=smem, size = 0x4, offset = 0x4, fixed_abs, tag = 'smem constant byte address 0x4 - core index']
  #allocation1 [shape = 'u32[144,128]{1,0:T(1,128)}', space=vmem, size = 0x12000, scoped, tag = 'internal scratch']
  %s0 = inlined_call_operand.vmem [shape: f32[8,32], index: 0, kind: input, shape index: {}]
  %s1 = inlined_call_operand.vmem [shape: f32[64,32], index: 1, kind: input, shape index: {}]
  %s2 = inlined_call_operand.vmem [shape: f32[1,64], index: 2, kind: input, shape index: {}]
  %s3 = inlined_call_operand.hbm [shape: f32[8,64], index: 3, kind: output, shape index: {}]
  %s4 = sld [smem:[#allocation0]]
  $region22: #{tpu_custom_call.1} parent=0
    _
  %s6 = ssub.s32 1, %s4
  %s7 = scalar_select 0, %s6, %s4
  $region1: #{tpu_custom_call.1} parent=0
    #allocation2 [shape = 'u8[4096]{0}', space=vmem, size = 0x1000, scoped, tag = 'output window, operand 0, single buffered']
    #allocation3 [shape = 's32[1]{0}', space=sflag, size = 0x4, scoped, tag = 'scoped memory for tpu_custom_call.1']
    %8 = vsyncpa [#allocation3], 0
    // Predicated region
    $region2: #{tpu_custom_call.1} parent=1 // pred_check
      _
    $region3: #{tpu_custom_call.1} parent=1 // pred_check_branch
      %10 = sbr.rel (0) target = $region5
    $region4: #{tpu_custom_call.1} parent=1 // pred_region
      _
    $region5: #{tpu_custom_call.1} parent=1 // pred_fallthru
      _
    // Predicated region
    $region6: #{tpu_custom_call.1} parent=1 // pred_check
      _
    $region7: #{tpu_custom_call.1} parent=1 // pred_check_branch
      %12 = sbr.rel (0) target = $region9
    $region8: #{tpu_custom_call.1} parent=1 // pred_region
      _
    $region9: #{tpu_custom_call.1} parent=1 // pred_fallthru
      _
    // Predicated region
    $region10: #{tpu_custom_call.1} parent=1 // pred_check
      _
    $region11: #{tpu_custom_call.1} parent=1 // pred_check_branch
      %14 = sbr.rel (0) target = $region13
    $region12: #{tpu_custom_call.1} parent=1 // pred_region
      _
    $region13: #{tpu_custom_call.1} parent=1 // pred_fallthru
      _
    %v15 = vld [vmem:[%s0] sm:$0xff]
    %v16 = vld [vmem:[%s1] sm:$0xff]
    %v17 = vld [vmem:[%s1 + $0x8] sm:$0xff]
    %v18 = vld [vmem:[%s1 + $0x10] sm:$0xff]
    %v19 = vld [vmem:[%s1 + $0x18] sm:$0xff]
    %v20 = vld [vmem:[%s1 + $0x20] sm:$0xff]
    %v21 = vld [vmem:[%s1 + $0x28] sm:$0xff]
    %v22 = vld [vmem:[%s1 + $0x30] sm:$0xff]
    %v23 = vld [vmem:[%s1 + $0x38] sm:$0xff]
    %v24 = vld [vmem:[%s2] sm:$0x1]
    %v26 = vlaneseq
    %v27 = vshrl.u32 %v26, 7
    %v28 = vsub.s32 0, %v27
    %v29 = vrot.slane %v24, %v28
    %vm31 = vcmask 261120
    %v33 = vsel %vm31, %v15, 0
    %v36 = vsel %vm31, %v16, 0
    %v39 = vsel %vm31, %v17, 0
    %v42 = vsel %vm31, %v18, 0
    %v45 = vsel %vm31, %v19, 0
    %v48 = vsel %vm31, %v20, 0
    %v51 = vsel %vm31, %v21, 0
    %v54 = vsel %vm31, %v22, 0
    %v57 = vsel %vm31, %v23, 0
    %59 = vmatprep.subr.mxu0 0.0
    %60 = vmatpush1.xpose.msra.mxu0 %v36
    %61 = vmatprep.subr.mxu0 0.0
    %62 = vmatpush1.xpose.msra.mxu0 %v39
    %63 = vmatprep.subr.mxu0 0.0
    %64 = vmatpush1.xpose.msra.mxu0 %v42
    %65 = vmatprep.subr.mxu0 0.0
    %66 = vmatpush1.xpose.msra.mxu0 %v45
    %67 = vmatprep.subr.mxu0 0.0
    %68 = vmatpush1.xpose.msra.mxu0 %v48
    %69 = vmatprep.subr.mxu0 0.0
    %70 = vmatpush1.xpose.msra.mxu0 %v51
    %71 = vmatprep.subr.mxu0 0.0
    %72 = vmatpush1.xpose.msra.mxu0 %v54
    %73 = vmatprep.subr.mxu0 0.0
    %74 = vmatpush1.xpose.msra.mxu0 %v57
    %75 = vmatprep.subr.mxu0 0.0
    %76 = vmatpush1.xpose.msra.mxu0 0.0
    %77 = vmatprep.subr.mxu0 0.0
    %78 = vmatpush1.xpose.msra.mxu0 0.0
    %79 = vmatprep.subr.mxu0 0.0
    %80 = vmatpush1.xpose.msra.mxu0 0.0
    %81 = vmatprep.subr.mxu0 0.0
    %82 = vmatpush1.xpose.msra.mxu0 0.0
    %83 = vmatprep.subr.mxu0 0.0
    %84 = vmatpush1.xpose.msra.mxu0 0.0
    %85 = vmatprep.subr.mxu0 0.0
    %86 = vmatpush1.xpose.msra.mxu0 0.0
    %87 = vmatprep.subr.mxu0 0.0
    %88 = vmatpush1.xpose.msra.mxu0 0.0
    %89 = vmatprep.subr.mxu0 0.0
    %90 = vmatpush1.xpose.msra.mxu0 0.0
    %91 = vmatprep.subr.mxu0 0.0
    %92 = vmatpush1.xpose.msra.mxu0 0.0
    %93 = vmatprep.subr.mxu0 0.0
    %94 = vmatpush1.xpose.msra.mxu0 0.0
    %95 = vmatprep.subr.mxu0 0.0
    %96 = vmatpush1.xpose.msra.mxu0 0.0
    %97 = vmatprep.subr.mxu0 0.0
    %98 = vmatpush1.xpose.msra.mxu0 0.0
    %99 = vmatprep.subr.mxu0 0.0
    %100 = vmatpush1.xpose.msra.mxu0 0.0
    %101 = vmatprep.subr.mxu0 0.0
    %102 = vmatpush1.xpose.msra.mxu0 0.0
    %103 = vmatprep.subr.mxu0 0.0
    %104 = vmatpush1.xpose.msra.mxu0 0.0
    %105 = vmatprep.subr.mxu0 0.0
    %106 = vmatpush1.xpose.msra.mxu0 0.0
    %107 = vmatprep.subr.mxu0 0.0
    %108 = vmatpush1.xpose.msra.mxu0 0.0
    %109 = vmatprep.subr.mxu0 0.0
    %110 = vmatpush1.xpose.msra.mxu0 0.0
    %111 = vmatprep.subr.mxu0 0.0
    %112 = vmatpush1.xpose.msra.mxu0 0.0
    %113 = vmatprep.subr.mxu0 0.0
    %114 = vmatpush1.xpose.msra.mxu0 0.0
    %115 = vmatprep.subr.mxu0 0.0
    %116 = vmatpush1.xpose.msra.mxu0 0.0
    %117 = vmatprep.subr.mxu0 0.0
    %118 = vmatpush1.xpose.msra.mxu0 0.0
    %119 = vmatprep.subr.mxu0 0.0
    %120 = vmatpush1.xpose.msra.mxu0 0.0
    %121 = vmatprep.subr.mxu0 0.0
    %122 = vmatpush1.xpose.msra.mxu0 0.0
    %123 = vmatprep.mubr.f32.mxu0 0.0
    %124 = vmatmul.mubr.f32.gmra.mrb[0].mxu0 %v33
    %v125 = vpop.f32.mrb[0].mxu0
    %v126 = vadd.f32 %v29, %v125
    %v127 = vpop.f32.mrb[0].mxu0
    %128 = vdwg.mxu0
    %vm129 = vcmask 523264
    %130 = vst.msk [vmem:[#allocation2] sm:$0xff] %vm129, %v126
    // Predicated region
    $region14: #{tpu_custom_call.1} parent=1 // pred_check
      _
    $region15: #{tpu_custom_call.1} parent=1 // pred_check_branch
      %132 = sbr.rel (0) target = $region17
    $region16: #{tpu_custom_call.1} parent=1 // pred_region
      %s134 = ssub.s32 128, 128
      %135 = vsyncadd [#allocation3], %s134
      %s137 = sshll.u32 [#allocation2], 4
      %s138 = int_to_ptr.vmem [resolvable:$true] %s137
      %140 = dma.vmem_to_hbm [thread:$0]  %s138, 128, %s3, [#allocation3]
    $region17: #{tpu_custom_call.1} parent=1 // pred_fallthru
      _
    // Predicated region
    $region18: #{tpu_custom_call.1} parent=1 // pred_check
      _
    $region19: #{tpu_custom_call.1} parent=1 // pred_check_branch
      %142 = sbr.rel (0) target = $region21
    $region20: #{tpu_custom_call.1} parent=1 // pred_region
      %143 = dma.done [#allocation3], 128
    $region21: #{tpu_custom_call.1} parent=1 // pred_fallthru
      _
    %144 = vsyncpa [#allocation3], 1

</llo_original>
